<compile_context>
chip_gen: v5e
topology: v5e:2x2
jax: 0.10.0
libtpu: 0.0.40
codegen_flags: <defaults>
</compile_context>

<pallas_src>
import numpy as np
import jax
import jax.numpy as jnp
from jax.experimental import pallas as pl
from jax.experimental.pallas import tpu as pltpu


def _round_up(x, m):
    return (x + m - 1) // m * m


def _round_down(x, m):
    return (x // m) * m


# --------------------- 1x1-conv segmentation head (train path) ---------------------

def _head_kernel(x_ref, w_ref, b_ref, o_ref):
    # x: (1, Cin, TP)   w: (Ccls, Cin)   b: (Ccls, 1) f32   o: (1, Ccls, TP)
    # Pixels are on the lane axis -> lane-dense load / compute / store.
    acc = jnp.dot(w_ref[...], x_ref[0], preferred_element_type=jnp.float32)
    o_ref[0] = (acc + b_ref[...]).astype(o_ref.dtype)


def conv1x1_head(x, w, b, *, max_tile_p=65536):
    """1x1 conv (segmentation head), NCHW in / NCHW out, pixels on lanes.

    Memory-bound streaming kernel: large lane-dense pixel tiles, no wrapper
    pad/crop (Pallas edge blocks handle non-128-multiple H*W), input dtype
    preserved end-to-end (bf16 in -> bf16 logits out, f32 accumulate)."""
    N, Cin, H, W = x.shape
    Ccls = w.shape[0]
    HW = H * W

    # Biggest lane-aligned tile <= max_tile_p; never degenerate to 128 lanes
    # unless the image itself is tiny.
    if HW >= 128:
        tile_p = min(max_tile_p, _round_down(HW, 128))
    else:
        tile_p = HW                       # single block == full (tiny) dim
    grid_p = pl.cdiv(HW, tile_p)

    x_flat = x.reshape(N, Cin, HW)                     # metadata-only reshape
    w = w.astype(x.dtype)                              # dot operands share dtype
    b = b.reshape(Ccls, 1).astype(jnp.float32)         # bias added in f32

    out = pl.pallas_call(
        _head_kernel,
        out_shape=jax.ShapeDtypeStruct((N, Ccls, HW), x.dtype),
        grid=(N, grid_p),
        in_specs=[
            pl.BlockSpec((1, Cin, tile_p), lambda n, p: (n, 0, p)),
            pl.BlockSpec((Ccls, Cin), lambda n, p: (0, 0)),
            pl.BlockSpec((Ccls, 1), lambda n, p: (0, 0)),
        ],
        out_specs=pl.BlockSpec((1, Ccls, tile_p), lambda n, p: (n, 0, p)),
        compiler_params=pltpu.CompilerParams(
            dimension_semantics=("parallel", "parallel")),
    )(x_flat, w, b)
    return out.reshape(N, Ccls, H, W)


# --------------- fused head + bilinear upsample + argmax (test path) ---------------

def _bilinear_matrix(out_size, in_size):
    """Row-interp matrix matching F.interpolate(mode='bilinear', align_corners=False)."""
    scale = in_size / out_size
    m = np.zeros((out_size, in_size), dtype=np.float32)
    for o in range(out_size):
        src = (o + 0.5) * scale - 0.5
        src = max(src, 0.0)
        i0 = min(int(np.floor(src)), in_size - 1)
        i1 = min(i0 + 1, in_size - 1)
        frac = src - i0
        m[o, i0] += 1.0 - frac
        m[o, i1] += frac
    return m


def _make_fused_kernel(cin, ccls):
    def kernel(img_ref, ry_ref, rxt_ref, w_ref, b_ref, o_ref):
        # img: (1, Cin, Hin, Win) bf16   ry: (TH, Hin) bf16   rxt: (Win, TW) bf16
        # w:   (Ccls, Cin) f32 SMEM      b: (Ccls,)    f32 SMEM   o: (1, TH, TW) i32
        ry = ry_ref[...]
        rxt = rxt_ref[...]
        # Separable bilinear upsample of the Cin image channels (bf16 MXU,
        # f32 accumulate).  Low-res logits are never formed / never hit HBM.
        ups = []
        for ci in range(cin):                                        # static unroll
            t = jnp.dot(ry, img_ref[0, ci],
                        preferred_element_type=jnp.float32)          # (TH, Win) f32
            ups.append(jnp.dot(t.astype(jnp.bfloat16), rxt,
                               preferred_element_type=jnp.float32))  # (TH, TW) f32
        # 1x1 conv head on the upsampled tile (VPU FMAs, scalar weights from
        # SMEM) + running argmax.  Valid because conv & bilinear are linear
        # and the bilinear weights sum to 1 per output pixel (bias passes
        # through).  Scoring stays on the VPU: an MXU dot here would run at
        # M=Ccls, K=Cin (tiny) plus a lane-flatten relayout -- not profitable.
        best = None
        idx = None
        for c in range(ccls):                                        # static unroll
            score = ups[0] * w_ref[c, 0]
            for ci in range(1, cin):
                score = score + ups[ci] * w_ref[c, ci]
            score = score + b_ref[c]
            if c == 0:
                best = score
                idx = jnp.zeros(score.shape, dtype=jnp.int32)
            else:
                take = score > best        # strict '>': first max wins (torch tie-break)
                idx = jnp.where(take, c, idx)
                best = jnp.maximum(best, score)
        o_ref[0] = idx
    return kernel


def fused_head_upsample_argmax(image, w, b, out_h, out_w,
                               *, max_row_tile=128, max_col_tile=2048):
    """conv1x1 head + F.interpolate(bilinear, align_corners=False) + argmax(dim=1),
    fused into one Pallas kernel (low-res logits never touch HBM)."""
    N, Cin, Hin, Win = image.shape
    Ccls = w.shape[0]

    # Row tile (sublane axis): 128 rows, or the whole (8-aligned) output when small.
    TH = min(max_row_tile, _round_up(out_h, 8))
    n_row = pl.cdiv(out_h, TH)
    # Column tile (lane axis): big lane-dense tiles; width-tiled for very wide
    # labels so the (Win,TW)/(TH,TW) working set stays inside v7x's 64 MiB VMEM.
    if out_w >= 128:
        TW = min(max_col_tile, _round_down(out_w, 128))
    else:
        TW = out_w
    n_col = pl.cdiv(out_w, TW)

    # Host-built separable interpolation matrices, zero-padded to full grid
    # coverage so all kernel READS stay in bounds; out-of-range output rows /
    # columns are dropped by Pallas' masked edge-block stores -> no wrapper crop.
    ry = np.zeros((n_row * TH, Hin), dtype=np.float32)
    ry[:out_h] = _bilinear_matrix(out_h, Hin)
    rxt = np.zeros((Win, n_col * TW), dtype=np.float32)
    rxt[:, :out_w] = _bilinear_matrix(out_w, Win).T

    if image.dtype != jnp.bfloat16:
        image = image.astype(jnp.bfloat16)           # bf16 MXU operands
    ry = jnp.asarray(ry, dtype=jnp.bfloat16)
    rxt = jnp.asarray(rxt, dtype=jnp.bfloat16)

    # Scoped-VMEM budget derived from the actual working set (double-buffered
    # blocks + in-kernel f32 live values), instead of a flat 48 MiB.
    blk = 2 * (Cin * Hin * Win * 2 + TH * Hin * 2 + Win * TW * 2 + TH * TW * 4)
    live = Cin * TH * (Win + TW) * 4 + 3 * TH * TW * 4
    vmem_limit = int(min(56 * 2**20, max(32 * 2**20, 2 * (blk + live))))

    out = pl.pallas_call(
        _make_fused_kernel(Cin, Ccls),
        out_shape=jax.ShapeDtypeStruct((N, out_h, out_w), jnp.int32),
        grid=(N, n_row, n_col),
        in_specs=[
            pl.BlockSpec((1, Cin, Hin, Win), lambda n, t, u: (n, 0, 0, 0)),
            pl.BlockSpec((TH, Hin), lambda n, t, u: (t, 0)),
            pl.BlockSpec((Win, TW), lambda n, t, u: (0, u)),
            pl.BlockSpec(memory_space=pltpu.MemorySpace.SMEM),   # conv weights (scalars)
            pl.BlockSpec(memory_space=pltpu.MemorySpace.SMEM),   # conv bias (scalars)
        ],
        out_specs=pl.BlockSpec((1, TH, TW), lambda n, t, u: (n, t, u)),
        compiler_params=pltpu.CompilerParams(
            dimension_semantics=("parallel", "parallel", "parallel"),
            vmem_limit_bytes=vmem_limit),
    )(image, ry, rxt, w.astype(jnp.float32), b.astype(jnp.float32))
    return out


# ----------------------- Module port -----------------------

class BaseSegmentator:
    """JAX/Pallas port of RDF-GAN BaseSegmentator.

    forward_net is abstract in the original; here it is instantiated as a
    deterministic 1x1-conv segmentation head so the forward pass is runnable.
    In test mode the (linear) head is fused into the upsample+argmax kernel;
    the result is mathematically identical to forward_net -> interpolate ->
    argmax (up to f32/bf16 rounding of near-tie logits)."""

    def __init__(self, in_channels=3, num_classes=8, key=None):
        key = jax.random.PRNGKey(0) if key is None else key
        kw, kb = jax.random.split(key)
        # PyTorch Conv2d-style layout: (out_channels, in_channels)
        self.w = jax.random.normal(kw, (num_classes, in_channels), jnp.float32) * 0.1
        self.b = jax.random.normal(kb, (num_classes,), jnp.float32) * 0.01
        self.num_classes = num_classes
        self.in_channels = in_channels

    def forward_net(self, image, **kwargs):
        # concrete stand-in for the abstract forward_net (1x1-conv head)
        return conv1x1_head(image, self.w, self.b)

    def forward(self, data, mode='train', **kwargs):
        if mode == 'train':
            return self.forward_train(data, **kwargs)
        else:
            return self.forward_test(data, **kwargs)

    def forward_train(self, data, image_type='rgb', device=None):
        if isinstance(data, dict):
            if image_type == 'rgb':
                image = data['image']
            elif image_type == 'depth':
                image = data['depth']
            else:
                raise NotImplementedError
            # .to(device): no-op in JAX (arrays already live on the default TPU device)
            pred = self.forward_net(image)
        else:
            pred = self.forward_net(data)
        return pred

    def forward_test(self, data, image_type='rgb', device=None):
        if image_type == 'rgb':
            image = data['image']
        elif image_type == 'depth':
            image = data['depth']
        else:
            raise NotImplementedError(
                f'The supported image types are RGB and depth, but got {image_type}')
        label = data['label_origin']
        assert isinstance(label, list)
        assert len(label) == 1, 'Only support single frame inference so far'
        image_h, image_w = label[0].shape
        # fused: forward_net (1x1 head) + F.interpolate(bilinear, align_corners=False)
        #        + argmax(dim=1), all inside one Pallas kernel.
        prediction = fused_head_upsample_argmax(image, self.w, self.b, image_h, image_w)
        # TODO(synk): torch.argmax returns int64; int32 class ids are returned here (.cpu() omitted).
        return [dict(prediction=prediction, label=label[0])]

    def init_weights(self):
        pass


# ----------------------- demo / smoke test -----------------------

if __name__ == "__main__":
    key = jax.random.PRNGKey(0)
    k_img, k_lbl, k_par = jax.random.split(key, 3)

    model = BaseSegmentator(in_channels=3, num_classes=8, key=k_par)

    # train mode: batch of RGB images, NCHW
    image_train = jax.random.normal(k_img, (2, 3, 16, 16), jnp.float32)
    pred_train = model.forward({'image': image_train}, mode='train')
    jax.block_until_ready(pred_train)
    assert pred_train.shape == (2, 8, 16, 16)
    # numerical check of the head against a pure-JAX reference
    ref = (jnp.einsum('ci,nihw->nchw', model.w, image_train)
           + model.b[None, :, None, None])
    assert bool(jnp.allclose(pred_train, ref, atol=1e-4, rtol=1e-4))

    # test mode: single-frame inference, upsample to label resolution + argmax
    image_test = image_train[:1]
    label = jax.random.randint(k_lbl, (32, 32), 0, 8, jnp.int32)
    out = model.forward({'image': image_test, 'label_origin': [label]}, mode='test')
    pred = out[0]['prediction']
    jax.block_until_ready(pred)
    assert pred.shape == (1, 32, 32)
    assert pred.dtype == jnp.int32
    assert int(pred.min()) >= 0 and int(pred.max()) < model.num_classes

    # f32 reference (conv head -> bilinear upsample -> argmax); the fused bf16
    # kernel may flip only near-tie pixels, so check a high agreement rate.
    logits = (jnp.einsum('ci,nihw->nchw', model.w, image_test)
              + model.b[None, :, None, None])
    ry_f = jnp.asarray(_bilinear_matrix(32, 16))
    rx_f = jnp.asarray(_bilinear_matrix(32, 16))
    up_ref = jnp.einsum('oh,nchw,pw->ncop', ry_f, logits, rx_f)
    ref_idx = jnp.argmax(up_ref, axis=1).astype(jnp.int32)
    agreement = float(jnp.mean((pred == ref_idx).astype(jnp.float32)))
    assert agreement >= 0.80, f"argmax agreement too low: {agreement}"

    print("KERNEL_OK")
</pallas_src>

<mosaic_0001>
module attributes {stable_mosaic.version = 11 : i64} {
  func.func @_head_kernel(%arg0: i32, %arg1: i32, %arg2: memref<1x3x256xf32, #tpu.memory_space<vmem>>, %arg3: memref<8x3xf32, #tpu.memory_space<vmem>>, %arg4: memref<8x1xf32, #tpu.memory_space<vmem>>, %arg5: memref<1x8x256xf32, #tpu.memory_space<vmem>>) attributes {dimension_semantics = [#tpu.dimension_semantics<parallel>, #tpu.dimension_semantics<parallel>], iteration_bounds = array<i64: 2, 1>, scalar_prefetch = 0 : i64, scratch_operands = 0 : i64, tpu.core_type = #tpu.core_type<tc>, window_params = [{transform_indices = @transform_0, window_bounds = array<i64: 1, 3, 256>}, {pipeline_mode = #tpu.pipeline_mode<synchronous>, transform_indices = @transform_1, window_bounds = array<i64: 8, 3>}, {pipeline_mode = #tpu.pipeline_mode<synchronous>, transform_indices = @transform_2, window_bounds = array<i64: 8, 1>}, {transform_indices = @transform_3, window_bounds = array<i64: 1, 8, 256>}]} {
    %c0 = arith.constant 0 : index
    %c0_0 = arith.constant 0 : index
    %0 = vector.load %arg3[%c0, %c0_0] : memref<8x3xf32, #tpu.memory_space<vmem>>, vector<8x3xf32>
    %c0_1 = arith.constant 0 : index
    %c0_2 = arith.constant 0 : index
    %c0_3 = arith.constant 0 : index
    %1 = vector.load %arg2[%c0_1, %c0_2, %c0_3] : memref<1x3x256xf32, #tpu.memory_space<vmem>>, vector<1x3x256xf32>
    %2 = vector.shape_cast %1 : vector<1x3x256xf32> to vector<3x256xf32>
    %cst = arith.constant dense<0.000000e+00> : vector<8x256xf32>
    %3 = tpu.matmul %0, %2, %cst {dimension_numbers = #tpu.dot_dimension_numbers<[1], [0], [0], [1], [0, 0, 1, 1], [], []>} : vector<8x3xf32>, vector<3x256xf32>, vector<8x256xf32> -> vector<8x256xf32>
    %c0_4 = arith.constant 0 : index
    %c0_5 = arith.constant 0 : index
    %4 = vector.load %arg4[%c0_4, %c0_5] : memref<8x1xf32, #tpu.memory_space<vmem>>, vector<8x1xf32>
    %5 = vector.broadcast %4 : vector<8x1xf32> to vector<8x256xf32>
    %6 = arith.addf %3, %5 : vector<8x256xf32>
    %c0_6 = arith.constant 0 : index
    %c0_7 = arith.constant 0 : index
    %c0_8 = arith.constant 0 : index
    %7 = vector.load %arg5[%c0_6, %c0_7, %c0_8] : memref<1x8x256xf32, #tpu.memory_space<vmem>>, vector<1x8x256xf32>
    %8 = vector.shape_cast %7 : vector<1x8x256xf32> to vector<8x256xf32>
    %9 = vector.shape_cast %6 : vector<8x256xf32> to vector<1x8x256xf32>
    tpu.vector_store %arg5[%c0_6, %c0_7, %c0_8], %9 {strides = array<i32>} : memref<1x8x256xf32, #tpu.memory_space<vmem>>, vector<1x8x256xf32>,
    return
  }
  func.func @transform_0(%arg0: i32, %arg1: i32) -> (i32, i32, i32) {
    %c0_i32 = arith.constant 0 : i32
    %c0_i32_0 = arith.constant 0 : i32
    return %arg0, %c0_i32, %arg1 : i32, i32, i32
  }
  func.func @transform_1(%arg0: i32, %arg1: i32) -> (i32, i32) {
    %c0_i32 = arith.constant 0 : i32
    %c0_i32_0 = arith.constant 0 : i32
    %c0_i32_1 = arith.constant 0 : i32
    return %c0_i32, %c0_i32_0 : i32, i32
  }
  func.func @transform_2(%arg0: i32, %arg1: i32) -> (i32, i32) {
    %c0_i32 = arith.constant 0 : i32
    %c0_i32_0 = arith.constant 0 : i32
    %c0_i32_1 = arith.constant 0 : i32
    return %c0_i32, %c0_i32_0 : i32, i32
  }
  func.func @transform_3(%arg0: i32, %arg1: i32) -> (i32, i32, i32) {
    %c0_i32 = arith.constant 0 : i32
    %c0_i32_0 = arith.constant 0 : i32
    return %arg0, %c0_i32, %arg1 : i32, i32, i32
  }
}

</mosaic_0001>

<llo_original>
// kernel: tpu_custom_call.1
$region0: #{tpu_custom_call.1}
  #allocation0 [shape = 'u32[]', space=smem, size = 0x4, offset = 0x4, fixed_abs, tag = 'smem constant byte address 0x4 - core index']
  #allocation1 [shape = 'u32[72,128]{1,0:T(1,128)}', space=vmem, size = 0x9000, scoped, tag = 'internal scratch']
  %s0 = inlined_call_operand.vmem [shape: f32[2,3,256], index: 0, kind: input, shape index: {}]
  %s1 = inlined_call_operand.vmem [shape: f32[8,3], index: 1, kind: input, shape index: {}]
  %s2 = inlined_call_operand.vmem [shape: f32[8,1], index: 2, kind: input, shape index: {}]
  %s3 = inlined_call_operand.hbm [shape: f32[2,8,256], index: 3, kind: output, shape index: {}]
  %s4 = sld [smem:[#allocation0]]
  $region45: #{tpu_custom_call.1} parent=0
    _
  %s6 = ssub.s32 1, %s4
  %s7 = scalar_select 0, %s6, %s4
  $region1: #{tpu_custom_call.1} parent=0
    #allocation2 [shape = 'u8[16384]{0}', space=vmem, size = 0x4000, scoped, tag = 'output window, operand 0']
    #allocation3 [shape = 's32[2]{0}', space=sflag, size = 0x8, scoped, tag = 'scoped memory for tpu_custom_call.1']
    %8 = vsyncpa [#allocation3], 0
    %s9 = scalar_lea.sflag [#allocation3], 1
    %10 = vsyncpa %s9, 0
    loop: start=0, step=1, limit=4
    $region2: #{tpu_custom_call.1} parent=1 // loop_pre_header
      _
    $region3: #{tpu_custom_call.1} parent=1 // loop_header
      %s12 = sphi 0, %s16
      %p13 = scmp.ge.s32.totalorder %s12, 4
      %s19 = sphi 0, %s31
      %s20 = sphi 0, %s27
      %s21 = sphi 0, %s19
      %s22 = sphi 0, %s20
      %s23 = sphi 0, %s21
      %s24 = sphi 0, %s22
      %s36 = sphi 0, %s38
      %s39 = sphi 0, %s36
      %s40 = sphi 0, %s39
      %s56 = sphi 0, %s40
      %s60 = sphi 0, %s60
      %s62 = sphi 0, %s60
      %s63 = sphi 0, %s62
      %s77 = sphi 0, %s63
      %s81 = sphi 0, %s81
      %s83 = sphi 0, %s81
      %s84 = sphi 0, %s83
      %s98 = sphi 0, %s84
      %s106 = sphi 0, %s108
      %s109 = sphi 0, %s106
      %s110 = sphi 0, %s109
      %s126 = sphi 0, %s110
    $region4: #{tpu_custom_call.1} parent=1 // loop_header_branch
      %15 = sbr.rel (%p13) target = $region8
    $region5: #{tpu_custom_call.1} parent=1 // loop_body
      %s17 = ssub.s32 %s12, 1
      %s18 = ssub.s32 %s12, 2
      %s25 = sadd.s32 1, %s20
      %p26 = scmp.ge.s32.totalorder %s25, 1
      %s27 = scalar_select %p26, 0, %s25
      %s28 = sadd.s32 1, %s19
      %s29 = scalar_select %p26, %s28, %s19
      %p30 = scmp.ge.s32.totalorder %s29, 2
      %s31 = scalar_select %p30, 0, %s29
      %s32 = ssub.s32 %s19, %s31
      %s33 = ssub.s32 %s20, %s27
      %s34 = sor.u32 %s32, %s33
      %p35 = scmp.eq.s32.totalorder %s34, 0
      %s37 = sadd.s32 %s36, 1
      %s38 = scalar_select %p35, %s36, %s37
      %p41 = pneg %p35
      %p42 = scmp.eq.s32.totalorder %s12, 1
      %p43 = por %p41, %p42
      %p44 = scmp.ne.s32.totalorder %s36, %s39
      %p45 = scmp.eq.s32.totalorder %s12, 0
      %p46 = por %p44, %p45
      %p47 = scmp.ne.s32.totalorder %s36, %s39
      %p48 = scmp.eq.s32.totalorder %s17, 1
      %p49 = por %p47, %p48
      %p50 = scmp.ne.s32.totalorder %s39, %s40
      %p51 = scmp.eq.s32.totalorder %s17, 0
      %p52 = por %p50, %p51
      %p53 = scmp.ne.s32.totalorder %s39, %s40
      %p54 = scmp.eq.s32.totalorder %s18, 1
      %p55 = por %p53, %p54
      %p57 = scmp.ne.s32.totalorder %s40, %s56
      %p58 = scmp.eq.s32.totalorder %s18, 0
      %p59 = por %p57, %p58
      %s61 = sadd.s32 %s60, 1
      %p64 = scmp.eq.s32.totalorder %s12, 1
      %p65 = scmp.ne.s32.totalorder %s60, %s62
      %p66 = scmp.eq.s32.totalorder %s12, 0
      %p67 = por %p65, %p66
      %p68 = scmp.ne.s32.totalorder %s60, %s62
      %p69 = scmp.eq.s32.totalorder %s17, 1
      %p70 = por %p68, %p69
      %p71 = scmp.ne.s32.totalorder %s62, %s63
      %p72 = scmp.eq.s32.totalorder %s17, 0
      %p73 = por %p71, %p72
      %p74 = scmp.ne.s32.totalorder %s62, %s63
      %p75 = scmp.eq.s32.totalorder %s18, 1
      %p76 = por %p74, %p75
      %p78 = scmp.ne.s32.totalorder %s63, %s77
      %p79 = scmp.eq.s32.totalorder %s18, 0
      %p80 = por %p78, %p79
      %s82 = sadd.s32 %s81, 1
      %p85 = scmp.eq.s32.totalorder %s12, 1
      %p86 = scmp.ne.s32.totalorder %s81, %s83
      %p87 = scmp.eq.s32.totalorder %s12, 0
      %p88 = por %p86, %p87
      %p89 = scmp.ne.s32.totalorder %s81, %s83
      %p90 = scmp.eq.s32.totalorder %s17, 1
      %p91 = por %p89, %p90
      %p92 = scmp.ne.s32.totalorder %s83, %s84
      %p93 = scmp.eq.s32.totalorder %s17, 0
      %p94 = por %p92, %p93
      %p95 = scmp.ne.s32.totalorder %s83, %s84
      %p96 = scmp.eq.s32.totalorder %s18, 1
      %p97 = por %p95, %p96
      %p99 = scmp.ne.s32.totalorder %s84, %s98
      %p100 = scmp.eq.s32.totalorder %s18, 0
      %p101 = por %p99, %p100
      %s102 = ssub.s32 %s19, %s31
      %s103 = ssub.s32 %s20, %s27
      %s104 = sor.u32 %s102, %s103
      %p105 = scmp.eq.s32.totalorder %s104, 0
      %s107 = sadd.s32 %s106, 1
      %s108 = scalar_select %p105, %s106, %s107
      %p111 = pneg %p105
      %p112 = scmp.eq.s32.totalorder %s12, 1
      %p113 = por %p111, %p112
      %p114 = scmp.ne.s32.totalorder %s106, %s109
      %p115 = scmp.eq.s32.totalorder %s12, 0
      %p116 = por %p114, %p115
      %p117 = scmp.ne.s32.totalorder %s106, %s109
      %p118 = scmp.eq.s32.totalorder %s17, 1
      %p119 = por %p117, %p118
      %p120 = scmp.ne.s32.totalorder %s109, %s110
      %p121 = scmp.eq.s32.totalorder %s17, 0
      %p122 = por %p120, %p121
      %p123 = scmp.ne.s32.totalorder %s109, %s110
      %p124 = scmp.eq.s32.totalorder %s18, 1
      %p125 = por %p123, %p124
      %p127 = scmp.ne.s32.totalorder %s110, %s126
      %p128 = scmp.eq.s32.totalorder %s18, 0
      %p129 = por %p127, %p128
      %p130 = scmp.le.s32.totalorder 1, %s12
      %p131 = scmp.lt.s32.totalorder %s12, 3
      %p132 = pnand %p130, %p131
      %p133 = pneg %p132
      // Predicated region
      $region9: #{tpu_custom_call.1} parent=5 // pred_check
        _
      $region10: #{tpu_custom_call.1} parent=5 // pred_check_branch
        %135 = sbr.rel (%p132) target = $region12
      $region11: #{tpu_custom_call.1} parent=5 // pred_region
        %s136 = ssub.s32 %s12, 1
        // Predicated region
        $region13: #{tpu_custom_call.1} parent=11 // pred_check
          %p137 = pneg %p73
        $region14: #{tpu_custom_call.1} parent=11 // pred_check_branch
          %139 = sbr.rel (%p137) target = $region16
        $region15: #{tpu_custom_call.1} parent=11 // pred_region
          _
        $region16: #{tpu_custom_call.1} parent=11 // pred_fallthru
          _
        // Predicated region
        $region17: #{tpu_custom_call.1} parent=11 // pred_check
          %p140 = pneg %p94
        $region18: #{tpu_custom_call.1} parent=11 // pred_check_branch
          %142 = sbr.rel (%p140) target = $region20
        $region19: #{tpu_custom_call.1} parent=11 // pred_region
          _
        $region20: #{tpu_custom_call.1} parent=11 // pred_fallthru
          _
      $region12: #{tpu_custom_call.1} parent=5 // pred_fallthru
        _
      %p143 = scmp.lt.s32.totalorder %s12, 2
      // Predicated region
      $region21: #{tpu_custom_call.1} parent=5 // pred_check
        %p144 = pneg %p143
      $region22: #{tpu_custom_call.1} parent=5 // pred_check_branch
        %146 = sbr.rel (%p144) target = $region24
      $region23: #{tpu_custom_call.1} parent=5 // pred_region
        // Predicated region
        $region25: #{tpu_custom_call.1} parent=23 // pred_check
          %p147 = pneg %p46
        $region26: #{tpu_custom_call.1} parent=23 // pred_check_branch
          %149 = sbr.rel (%p147) target = $region28
        $region27: #{tpu_custom_call.1} parent=23 // pred_region
          %s150 = smul.u32 2, %s20
          %p151 = scmp.lt.s32.totalorder %s19, 1
          %s152 = scalar_select %p151, %s19, 1
          %p153 = scmp.lt.s32.totalorder %s150, 1
          %s154 = scalar_select %p153, %s150, 1
          %s155 = smul.addr %s152, 2
          %s156 = sadd.s32 %s154, %s155
          %s157 = smul.addr %s156, 4
          %s158 = scalar_lea.vmem %s0, %s157
          %s159 = smul.u32 2, %s20
        $region28: #{tpu_custom_call.1} parent=23 // pred_fallthru
          _
      $region24: #{tpu_custom_call.1} parent=5 // pred_fallthru
        _
      %p160 = scmp.le.s32.totalorder 1, %s12
      %p161 = scmp.lt.s32.totalorder %s12, 3
      %p162 = pnand %p160, %p161
      %p163 = pneg %p162
      // Predicated region
      $region29: #{tpu_custom_call.1} parent=5 // pred_check
        _
      $region30: #{tpu_custom_call.1} parent=5 // pred_check_branch
        %165 = sbr.rel (%p162) target = $region32
      $region31: #{tpu_custom_call.1} parent=5 // pred_region
        %s166 = ssub.s32 %s12, 1
        %s167 = smul.u32 2, %s22
        %p168 = scmp.lt.s32.totalorder %s21, 1
        %s169 = scalar_select %p168, %s21, 1
        %p170 = scmp.lt.s32.totalorder %s167, 1
        %s171 = scalar_select %p170, %s167, 1
        %s172 = smul.addr %s169, 2
        %s173 = sadd.s32 %s171, %s172
        %s174 = smul.addr %s173, 4
        %s175 = scalar_lea.vmem %s0, %s174
        %p176 = pneg %p52
        %p177 = pneg %p49
        %p178 = pneg %p73
        %p179 = pneg %p70
        %p180 = pneg %p94
        %p181 = pneg %p91
        %p182 = pneg %p122
        %p183 = pneg %p119
        %s184 = sand.u32 %s109, 1
        %s185 = scalar_lea.sflag [#allocation3], %s184
        %s186 = sand.u32 %s109, 1
        %s187 = smul.addr %s186, 16
        %s188 = scalar_lea.vmem [#allocation2], %s187
        %s189 = smul.u32 2, %s22
        %p190 = scmp.lt.s32.totalorder %s21, 1
        %s191 = scalar_select %p190, %s21, 1
        %p192 = scmp.lt.s32.totalorder %s189, 1
        %s193 = scalar_select %p192, %s189, 1
        %s194 = smul.addr %s191, 2
        %s195 = sadd.s32 %s193, %s194
        %s196 = smul.addr %s195, 4
        %s197 = scalar_lea.vmem %s0, %s196
        %s198 = smul.u32 2, %s22
        %s199 = smul.u32 2, %s22
        %v200 = vld [vmem:[%s1] sm:$0xff]
        %v201 = vld [vmem:[%s197] sm:$0x77]
        %v202 = vld [vmem:[%s2] sm:$0xff]
        %204 = vset.pattern.permute.xlu0 0
        %205 = vperm.xlu0 %204, %v202
        %v206 = vpop.permute.xlu0 %205
        %209 = vst [vmem:[#allocation1] ss:$2 sm:$0xff] %v201
        %v210 = vld.sshfl [vmem:[#allocation1] sm:$0xff pattern:$0x75316420]
        %v211 = vld.sshfl [vmem:[#allocation1 + $0x8] sm:$0xff pattern:$0x75316420]
        %vm212 = vcmask 23552
        %v214 = vsel %vm212, %v200, 0
        %vm216 = vcmask 1042432
        %v217 = vsel %vm216, %v210, 0
        %v219 = vsel %vm216, %v211, 0
        %221 = vmatpush.msra.mxu0 0.0
        %222 = vmatpush.msra.mxu0 0.0
        %223 = vmatpush.msra.mxu0 0.0
        %224 = vmatpush.msra.mxu0 0.0
        %225 = vmatpush.msra.mxu0 0.0
        %226 = vmatpush.msra.mxu0 0.0
        %227 = vmatpush.msra.mxu0 0.0
        %228 = vmatpush.msra.mxu0 0.0
        %229 = vmatpush.msra.mxu0 0.0
        %230 = vmatpush.msra.mxu0 0.0
        %231 = vmatpush.msra.mxu0 0.0
        %232 = vmatpush.msra.mxu0 0.0
        %233 = vmatpush.msra.mxu0 0.0
        %234 = vmatpush.msra.mxu0 0.0
        %235 = vmatpush.msra.mxu0 0.0
        %236 = vmatpush.msra.mxu0 %v217
        %237 = vmatmul.f32.gmra.mxu0 %v214
        %v238 = vpop.f32.mrf.mxu0
        %v239 = vadd.f32 %v206, %v238
        %240 = vdwg.mxu0
        %241 = vmatpush.msra.mxu0 0.0
        %242 = vmatpush.msra.mxu0 0.0
        %243 = vmatpush.msra.mxu0 0.0
        %244 = vmatpush.msra.mxu0 0.0
        %245 = vmatpush.msra.mxu0 0.0
        %246 = vmatpush.msra.mxu0 0.0
        %247 = vmatpush.msra.mxu0 0.0
        %248 = vmatpush.msra.mxu0 0.0
        %249 = vmatpush.msra.mxu0 0.0
        %250 = vmatpush.msra.mxu0 0.0
        %251 = vmatpush.msra.mxu0 0.0
        %252 = vmatpush.msra.mxu0 0.0
        %253 = vmatpush.msra.mxu0 0.0
        %254 = vmatpush.msra.mxu0 0.0
        %255 = vmatpush.msra.mxu0 0.0
        %256 = vmatpush.msra.mxu0 %v219
        %257 = vmatmul.f32.gmra.mxu0 %v214
        %v258 = vpop.f32.mrf.mxu0
        %v259 = vadd.f32 %v206, %v258
        %260 = vdwg.mxu0
        %261 = vst [vmem:[%s188] sm:$0xff] %v239
        %262 = vst [vmem:[%s188 + $0x8] sm:$0xff] %v259
        %s263 = sand.u32 %s109, 1
        %s264 = scalar_lea.sflag [#allocation3], %s263
        %s265 = sand.u32 %s109, 1
        %s266 = smul.addr %s265, 16
        %s267 = scalar_lea.vmem [#allocation2], %s266
        // Predicated region
        $region33: #{tpu_custom_call.1} parent=31 // pred_check
          %p268 = pneg %p119
        $region34: #{tpu_custom_call.1} parent=31 // pred_check_branch
          %270 = sbr.rel (%p268) target = $region36
        $region35: #{tpu_custom_call.1} parent=31 // pred_region
          %s271 = smul.u32 2, %s22
          %273 = vsyncadd %s264, 0
          %s274 = smul.addr %s21, 2
          %s275 = sadd.s32 %s271, %s274
          %s276 = smul.addr %s275, 8
          %s277 = scalar_lea.hbm %s3, %s276
          %s279 = sshll.u32 %s267, 4
          %s280 = int_to_ptr.vmem [resolvable:$true] %s279
          %s281 = sshll.u32 %s277, 4
          %s282 = int_to_ptr.hbm [resolvable:$true] %s281
          %284 = dma.vmem_to_hbm [thread:$0]  %s280, 256, %s282, %s264
        $region36: #{tpu_custom_call.1} parent=31 // pred_fallthru
          _
      $region32: #{tpu_custom_call.1} parent=5 // pred_fallthru
        _
      %p285 = scmp.le.s32.totalorder 2, %s12
      // Predicated region
      $region37: #{tpu_custom_call.1} parent=5 // pred_check
        %p286 = pneg %p285
      $region38: #{tpu_custom_call.1} parent=5 // pred_check_branch
        %288 = sbr.rel (%p286) target = $region40
      $region39: #{tpu_custom_call.1} parent=5 // pred_region
        %s289 = ssub.s32 %s12, 2
        // Predicated region
        $region41: #{tpu_custom_call.1} parent=39 // pred_check
          %p290 = pneg %p125
        $region42: #{tpu_custom_call.1} parent=39 // pred_check_branch
          %292 = sbr.rel (%p290) target = $region44
        $region43: #{tpu_custom_call.1} parent=39 // pred_region
          %s293 = sand.u32 %s110, 1
          %s294 = scalar_lea.sflag [#allocation3], %s293
          %s295 = sand.u32 %s110, 1
          %s296 = smul.addr %s295, 16
          %s297 = scalar_lea.vmem [#allocation2], %s296
          %299 = dma.done %s294, 256
        $region44: #{tpu_custom_call.1} parent=39 // pred_fallthru
          _
      $region40: #{tpu_custom_call.1} parent=5 // pred_fallthru
        _
    $region6: #{tpu_custom_call.1} parent=1 // loop_footer
      %s16 = sadd.s32 1, %s12
    $region7: #{tpu_custom_call.1} parent=1 // loop_footer_branch
      %11 = sbr.rel target = $region3
    $region8: #{tpu_custom_call.1} parent=1 // loop_exit
      _
    %300 = vsyncpa [#allocation3], 1
    %s301 = scalar_lea.sflag [#allocation3], 1
    %302 = vsyncpa %s301, 1

</llo_original>
